<compile_context>
chip_gen: v7x
topology: tpu7x:2x2x1
jax: 0.10.0
libtpu: 0.0.40
codegen_flags: <defaults>
</compile_context>

<pallas_src>
import functools
import math

import jax
import jax.numpy as jnp
from jax import lax
from jax.experimental import pallas as pl
from jax.experimental.pallas import tpu as pltpu

_LANES = 128
_SUBLANES = 8
_MAX_TILE_ROWS = 4096          # ~2 MiB f32 per input tile


def _round_up(x, m):
    return -(-x // m) * m


def _int_pow(x, e):
    """x**e for a static non-negative integer e via a multiply chain (VPU)."""
    if e == 0:
        return jnp.ones_like(x)
    result = None
    base = x
    while e > 0:
        if e & 1:
            result = base if result is None else result * base
        e >>= 1
        if e:
            base = base * base
    return result


def _tile_sum(x):
    """(tm, 128) f32 -> (8, 128) partial sums; tm must be a multiple of 8.

    Splits the row slabs into up to 8 independent accumulator chains (ILP)
    before the final combine, so the reduce stays hidden under the input DMA
    even at tm = 4096 (instead of a 511-deep serial add chain).
    """
    s = x.shape[0] // _SUBLANES
    k = math.gcd(s, 8)
    x4 = x.reshape(k, s // k, _SUBLANES, _LANES)
    return jnp.sum(jnp.sum(x4, axis=1), axis=0)


def _focal_kernel(p_ref, y_ref, out_ref, *, alpha, gamma, gamma_int,
                  binary_labels, needs_mask, tail_count):
    eps = jnp.float32(1e-07)
    one = jnp.float32(1.0)

    p = jnp.clip(p_ref[...].astype(jnp.float32), eps, one - eps)
    y = y_ref[...].astype(jnp.float32)

    if binary_labels:
        # Integer/bool-coded {0,1} labels: one compare + two selects.
        pos = y != jnp.float32(0.0)
        p_t = jnp.where(pos, p, one - p)
        alpha_t = jnp.where(pos, jnp.float32(alpha), jnp.float32(1.0 - alpha))
    else:
        # Exact algebraic form (also correct for soft float labels):
        # p_t = p*y + (1-p)*(1-y) = 1 - p - y + 2*p*y
        py = p * y
        p_t = (one - p) - y + (py + py)
        alpha_t = jnp.float32(1.0 - alpha) + jnp.float32(2.0 * alpha - 1.0) * y

    one_m_pt = one - p_t
    if gamma_int is not None:
        pw = _int_pow(one_m_pt, gamma_int)            # VPU multiply chain
    else:
        pw = jnp.power(one_m_pt, jnp.float32(gamma))  # EUP fallback

    loss = (-alpha_t) * pw * jnp.log(p_t)

    if needs_mask:
        # Only the last tile contains padded / out-of-range elements; all
        # other tiles take the lean unmasked path.  tail_count is a static
        # Python int (<= tm*128), so no int32-overflow risk for huge n.
        last = pl.program_id(0) == pl.num_programs(0) - 1

        @pl.when(last)
        def _():
            row = lax.broadcasted_iota(jnp.int32, loss.shape, 0)
            lane = lax.broadcasted_iota(jnp.int32, loss.shape, 1)
            valid = row * _LANES + lane < tail_count
            out_ref[...] = _tile_sum(jnp.where(valid, loss, jnp.float32(0.0)))

        @pl.when(jnp.logical_not(last))
        def _():
            out_ref[...] = _tile_sum(loss)
    else:
        out_ref[...] = _tile_sum(loss)


def focal_loss_binary(preds, labels, alpha=0.5, gamma=3):
    """Pallas implementation of binary focal loss (returns a float32 scalar)."""
    assert preds.shape == labels.shape
    n = preds.size
    assert n > 0

    # Keep labels narrow: bool -> int8 (1 B/elem), never upcast to f32 on host.
    if jnp.issubdtype(labels.dtype, jnp.bool_):
        labels = labels.astype(jnp.int8)
    elif jnp.dtype(labels.dtype).itemsize > 4:
        labels = labels.astype(jnp.float32 if jnp.issubdtype(labels.dtype,
                                                             jnp.floating)
                               else jnp.int32)
    if jnp.dtype(preds.dtype).itemsize > 4:
        preds = preds.astype(jnp.float32)

    binary_labels = not jnp.issubdtype(labels.dtype, jnp.floating)

    # Sublane packing of the narrowest dtype decides the row-tile granularity.
    pack = max(8,
               32 // jnp.dtype(preds.dtype).itemsize,
               32 // jnp.dtype(labels.dtype).itemsize)

    rows = -(-n // _LANES)
    if rows > _MAX_TILE_ROWS:
        tm = _MAX_TILE_ROWS
    elif rows >= 2 * pack:
        # Split into (at least) 2 tiles so both v7x TensorCores get work.
        tm = _round_up(-(-rows // 2), pack)
    else:
        # Tiny single-tile input: keep rows a multiple of 8 so the in-kernel
        # (-1, 8, 128) partial-sum reshape is valid (pad cost is negligible).
        rows = _round_up(rows, 8)
        tm = rows
    num_tiles = -(-rows // tm)

    pad = rows * _LANES - n          # only what the (rows, 128) reshape needs
    p_flat = preds.reshape(-1)
    y_flat = labels.reshape(-1)
    if pad:
        p_flat = jnp.pad(p_flat, (0, pad))
        y_flat = jnp.pad(y_flat, (0, pad))
    p2 = p_flat.reshape(rows, _LANES)
    y2 = y_flat.reshape(rows, _LANES)

    needs_mask = (pad != 0) or (rows % tm != 0)
    # Number of valid elements in the last tile's flat region (static int).
    tail_count = n - (num_tiles - 1) * tm * _LANES

    g = float(gamma)
    gamma_int = int(g) if (g.is_integer() and 0 <= g <= 16) else None

    kernel = functools.partial(
        _focal_kernel, alpha=float(alpha), gamma=g, gamma_int=gamma_int,
        binary_labels=bool(binary_labels), needs_mask=bool(needs_mask),
        tail_count=int(tail_count))

    partials = pl.pallas_call(
        kernel,
        out_shape=jax.ShapeDtypeStruct((num_tiles * _SUBLANES, _LANES),
                                       jnp.float32),
        grid_spec=pltpu.PrefetchScalarGridSpec(
            num_scalar_prefetch=0,
            grid=(num_tiles,),
            in_specs=[
                pl.BlockSpec((tm, _LANES), lambda i: (i, 0)),
                pl.BlockSpec((tm, _LANES), lambda i: (i, 0)),
            ],
            out_specs=pl.BlockSpec((_SUBLANES, _LANES), lambda i: (i, 0)),
        ),
        compiler_params=pltpu.CompilerParams(
            dimension_semantics=("parallel",)),   # independent tiles -> megacore
    )(p2, y2)

    # Tiny final reduce (num_tiles * 8 * 128 floats) + mean normalization.
    return jnp.sum(partials) / jnp.float32(n)


def _focal_loss_ref(preds, labels, alpha=0.5, gamma=3):
    eps = 1e-07
    p = jnp.clip(preds.astype(jnp.float32), eps, 1.0 - eps)
    y = labels.astype(jnp.float32)
    p_t = p * y + (1.0 - p) * (1.0 - y)
    alpha_t = alpha * y + (1.0 - alpha) * (1.0 - y)
    loss = -alpha_t * jnp.power(1.0 - p_t, gamma) * jnp.log(p_t)
    return jnp.mean(loss)


if __name__ == "__main__":
    key = jax.random.PRNGKey(0)
    k1, k2, k3, k4, k5, k6 = jax.random.split(key, 6)

    # Primary: NCHW sigmoid output map, batch=2, channels=4, 16x16; int8 labels.
    preds = jax.nn.sigmoid(jax.random.normal(k1, (2, 4, 16, 16), jnp.float32))
    labels = (jax.random.uniform(k2, (2, 4, 16, 16)) > 0.5).astype(jnp.int8)
    out = jax.block_until_ready(focal_loss_binary(preds, labels,
                                                  alpha=0.5, gamma=3))
    ref = _focal_loss_ref(preds, labels, alpha=0.5, gamma=3)
    assert jnp.allclose(out, ref, rtol=1e-5, atol=1e-6), (out, ref)

    # Unaligned tiny case (pad + tail mask), float labels (algebra path).
    preds2 = jax.nn.sigmoid(jax.random.normal(k3, (3, 5, 7, 11), jnp.float32))
    labels2 = (jax.random.uniform(k4, (3, 5, 7, 11)) > 0.5).astype(jnp.float32)
    out2 = jax.block_until_ready(focal_loss_binary(preds2, labels2,
                                                   alpha=0.25, gamma=2))
    ref2 = _focal_loss_ref(preds2, labels2, alpha=0.25, gamma=2)
    assert jnp.allclose(out2, ref2, rtol=1e-5, atol=1e-6), (out2, ref2)

    # Multi-tile path (2 tiles, edge block + gated tail mask), bool labels.
    preds3 = jax.nn.sigmoid(jax.random.normal(k5, (1, 3, 100, 200), jnp.float32))
    labels3 = jax.random.uniform(k6, (1, 3, 100, 200)) > 0.5
    out3 = jax.block_until_ready(focal_loss_binary(preds3, labels3,
                                                   alpha=0.5, gamma=3))
    ref3 = _focal_loss_ref(preds3, labels3, alpha=0.5, gamma=3)
    assert jnp.allclose(out3, ref3, rtol=1e-5, atol=1e-6), (out3, ref3)

    print("KERNEL_OK")
</pallas_src>

<mosaic_0001>
module attributes {stable_mosaic.version = 11 : i64} {
  func.func @_focal_kernel(%arg0: i32, %arg1: memref<16x128xf32, #tpu.memory_space<vmem>>, %arg2: memref<16x128xi8, #tpu.memory_space<vmem>>, %arg3: memref<8x128xf32, #tpu.memory_space<vmem>>) attributes {dimension_semantics = [#tpu.dimension_semantics<parallel>], iteration_bounds = array<i64: 1>, scalar_prefetch = 0 : i64, scratch_operands = 0 : i64, tpu.core_type = #tpu.core_type<tc>, window_params = [{transform_indices = @transform_0, window_bounds = array<i64: 16, 128>}, {transform_indices = @transform_1, window_bounds = array<i64: 16, 128>}, {transform_indices = @transform_2, window_bounds = array<i64: 8, 128>}]} {
    %c0 = arith.constant 0 : index
    %c0_0 = arith.constant 0 : index
    %0 = vector.load %arg1[%c0, %c0_0] : memref<16x128xf32, #tpu.memory_space<vmem>>, vector<16x128xf32>
    %cst = arith.constant 1.000000e+00 : f32
    %cst_1 = arith.constant 1.000000e-07 : f32
    %1 = arith.subf %cst, %cst_1 : f32
    %cst_2 = arith.constant 1.000000e-07 : f32
    %2 = vector.broadcast %cst_2 : f32 to vector<16x128xf32>
    %3 = arith.maximumf %2, %0 : vector<16x128xf32>
    %4 = vector.broadcast %1 : f32 to vector<16x128xf32>
    %5 = arith.minimumf %4, %3 : vector<16x128xf32>
    %c0_3 = arith.constant 0 : index
    %c0_4 = arith.constant 0 : index
    %6 = vector.load %arg2[%c0_3, %c0_4] : memref<16x128xi8, #tpu.memory_space<vmem>>, vector<16x128xi8>
    %7 = arith.sitofp %6 : vector<16x128xi8> to vector<16x128xf32>
    %cst_5 = arith.constant 0.000000e+00 : f32
    %8 = vector.broadcast %cst_5 : f32 to vector<16x128xf32>
    %9 = arith.cmpf one, %7, %8 : vector<16x128xf32>
    %cst_6 = arith.constant 1.000000e+00 : f32
    %10 = vector.broadcast %cst_6 : f32 to vector<16x128xf32>
    %11 = arith.subf %10, %5 : vector<16x128xf32>
    %12 = arith.select %9, %5, %11 : vector<16x128xi1>, vector<16x128xf32>
    %cst_7 = arith.constant 5.000000e-01 : f32
    %cst_8 = arith.constant 5.000000e-01 : f32
    %13 = vector.broadcast %cst_7 : f32 to vector<16x128xf32>
    %14 = vector.broadcast %cst_8 : f32 to vector<16x128xf32>
    %15 = arith.select %9, %13, %14 : vector<16x128xi1>, vector<16x128xf32>
    %cst_9 = arith.constant 1.000000e+00 : f32
    %16 = vector.broadcast %cst_9 : f32 to vector<16x128xf32>
    %17 = arith.subf %16, %12 : vector<16x128xf32>
    %18 = arith.mulf %17, %17 : vector<16x128xf32>
    %19 = arith.mulf %17, %18 : vector<16x128xf32>
    %cst_10 = arith.constant 0.000000e+00 : f32
    %20 = vector.broadcast %cst_10 : f32 to vector<16x128xf32>
    %21 = arith.subf %20, %15 : vector<16x128xf32>
    %22 = arith.mulf %21, %19 : vector<16x128xf32>
    %23 = math.log %12 : vector<16x128xf32>
    %24 = arith.mulf %22, %23 : vector<16x128xf32>
    %25 = vector.shape_cast %24 : vector<16x128xf32> to vector<2x1x8x128xf32>
    %cst_11 = arith.constant dense<0.000000e+00> : vector<2x8x128xf32>
    %26 = vector.multi_reduction <add>, %25, %cst_11 [1] : vector<2x1x8x128xf32> to vector<2x8x128xf32>
    %cst_12 = arith.constant dense<0.000000e+00> : vector<8x128xf32>
    %27 = vector.multi_reduction <add>, %26, %cst_12 [0] : vector<2x8x128xf32> to vector<8x128xf32>
    %c0_13 = arith.constant 0 : index
    %c0_14 = arith.constant 0 : index
    %28 = vector.load %arg3[%c0_13, %c0_14] : memref<8x128xf32, #tpu.memory_space<vmem>>, vector<8x128xf32>
    tpu.vector_store %arg3[%c0_13, %c0_14], %27 {strides = array<i32>} : memref<8x128xf32, #tpu.memory_space<vmem>>, vector<8x128xf32>,
    return
  }
  func.func @transform_0(%arg0: i32) -> (i32, i32) {
    %c0_i32 = arith.constant 0 : i32
    %c0_i32_0 = arith.constant 0 : i32
    return %arg0, %c0_i32 : i32, i32
  }
  func.func @transform_1(%arg0: i32) -> (i32, i32) {
    %c0_i32 = arith.constant 0 : i32
    %c0_i32_0 = arith.constant 0 : i32
    return %arg0, %c0_i32 : i32, i32
  }
  func.func @transform_2(%arg0: i32) -> (i32, i32) {
    %c0_i32 = arith.constant 0 : i32
    %c0_i32_0 = arith.constant 0 : i32
    return %arg0, %c0_i32 : i32, i32
  }
}

</mosaic_0001>

<llo_original>
// kernel: tpu_custom_call.1
$region0: #{tpu_custom_call.1}
  #allocation0 [shape = 'u32[]', space=smem, size = 0x4, offset = 0x4, fixed_abs, tag = 'smem constant byte address 0x4 - core index']
  #allocation1 [shape = 'u32[144,128]{1,0:T(1,128)}', space=vmem, size = 0x12000, scoped, tag = 'internal scratch']
  %s0 = inlined_call_operand.hbm [shape: f32[16,128], index: 0, kind: input, shape index: {}]
  %s1 = inlined_call_operand.hbm [shape: s8[16,128], index: 1, kind: input, shape index: {}]
  %s2 = inlined_call_operand.hbm [shape: f32[8,128], index: 2, kind: output, shape index: {}]
  %s3 = sld [smem:[#allocation0]]
  $region26: #{tpu_custom_call.1} parent=0
    _
  %s5 = ssub.s32 1, %s3
  %s6 = scalar_select 0, %s5, %s3
  $region1: #{tpu_custom_call.1} parent=0
    #allocation2 [shape = 'u8[8192]{0}', space=vmem, size = 0x2000, scoped, tag = 'input window, operand 0, single buffered']
    #allocation3 [shape = 's32[1]{0}', space=sflag, size = 0x4, scoped, tag = 'scoped memory for tpu_custom_call.1']
    #allocation4 [shape = 's32[1]{0}', space=sflag, size = 0x4, scoped, tag = 'scoped memory for tpu_custom_call.1']
    #allocation5 [shape = 'u8[2048]{0}', space=vmem, size = 0x800, scoped, tag = 'input window, operand 1, single buffered']
    #allocation6 [shape = 's32[1]{0}', space=sflag, size = 0x4, scoped, tag = 'scoped memory for tpu_custom_call.1']
    #allocation7 [shape = 'u8[4096]{0}', space=vmem, size = 0x1000, scoped, tag = 'output window, operand 0, single buffered']
    %7 = vsyncpa [#allocation3], 0
    %8 = vsyncpa [#allocation6], 0
    %9 = vsyncpa [#allocation4], 0
    // Predicated region
    $region2: #{tpu_custom_call.1} parent=1 // pred_check
      _
    $region3: #{tpu_custom_call.1} parent=1 // pred_check_branch
      %11 = sbr.rel (0) target = $region5
    $region4: #{tpu_custom_call.1} parent=1 // pred_region
      %s13 = ssub.s32 256, 256
      %14 = vsyncadd [#allocation3], %s13
      %s15 = sshll.u32 [#allocation2], 4
      %s16 = int_to_ptr.vmem [resolvable:$true] %s15
      %21 = dma.hbm_to_vmem [thread:$0]  %s0, 256, %s16, [#allocation3], 128, 128, 8
    $region5: #{tpu_custom_call.1} parent=1 // pred_fallthru
      _
    // Predicated region
    $region6: #{tpu_custom_call.1} parent=1 // pred_check
      _
    $region7: #{tpu_custom_call.1} parent=1 // pred_check_branch
      %23 = sbr.rel (0) target = $region9
    $region8: #{tpu_custom_call.1} parent=1 // pred_region
      %s25 = ssub.s32 64, 64
      %26 = vsyncadd [#allocation6], %s25
      %s27 = sshll.u32 [#allocation5], 4
      %s28 = int_to_ptr.vmem [resolvable:$true] %s27
      %33 = dma.hbm_to_vmem [thread:$0]  %s1, 64, %s28, [#allocation6], 32, 32, 2
    $region9: #{tpu_custom_call.1} parent=1 // pred_fallthru
      _
    // Predicated region
    $region10: #{tpu_custom_call.1} parent=1 // pred_check
      _
    $region11: #{tpu_custom_call.1} parent=1 // pred_check_branch
      %35 = sbr.rel (0) target = $region13
    $region12: #{tpu_custom_call.1} parent=1 // pred_region
      %36 = dma.done [#allocation3], 256
    $region13: #{tpu_custom_call.1} parent=1 // pred_fallthru
      _
    // Predicated region
    $region14: #{tpu_custom_call.1} parent=1 // pred_check
      _
    $region15: #{tpu_custom_call.1} parent=1 // pred_check_branch
      %38 = sbr.rel (0) target = $region17
    $region16: #{tpu_custom_call.1} parent=1 // pred_region
      %39 = dma.done [#allocation6], 64
    $region17: #{tpu_custom_call.1} parent=1 // pred_fallthru
      _
    %v40 = vld [vmem:[#allocation2] sm:$0xff]
    %v41 = vld [vmem:[#allocation2 + $0x8] sm:$0xff]
    %v42 = vmax.f32 %v40, 1e-07
    %v43 = vmax.f32 %v41, 1e-07
    %v44 = vmin.f32 %v42, 0.9999999
    %v45 = vmin.f32 %v43, 0.9999999
    %v46 = vld [vmem:[#allocation5] sm:$0x3]
    %v47 = vld [vmem:[#allocation5 + $0x2] sm:$0x3]
    %v48 = vunpack.c.0.s8 %v46
    %v49 = vunpack.c.0.s8 %v47
    %v50 = vcvt.s32.f32 %v48
    %v51 = vcvt.s32.f32 %v49
    %vm52 = vcmp.ne.f32.partialorder %v50, 0.0
    %vm53 = vcmp.ne.f32.partialorder %v51, 0.0
    %v54 = vsub.f32 1.0, %v44
    %v55 = vsub.f32 1.0, %v45
    %v56 = vsel %vm52, %v44, %v54
    %v57 = vsel %vm53, %v45, %v55
    %v58 = vsub.f32 1.0, %v56
    %v59 = vsub.f32 1.0, %v57
    %v60 = vmul.f32 %v58, %v58
    %v61 = vmul.f32 %v59, %v59
    %v62 = vmul.f32 %v58, %v60
    %v63 = vmul.f32 %v59, %v61
    %v64 = vmul.f32 %v62, -0.5
    %v65 = vmul.f32 %v63, -0.5
    %v66 = vlog2.pop %v56
    %v67 = vmul.f32 %v66, 0.6931472
    %v68 = vlog2.pop %v57
    %v69 = vmul.f32 %v68, 0.6931472
    %v70 = vmul.f32 %v64, %v67
    %v71 = vmul.f32 %v65, %v69
    %v72 = vadd.f32 %v70, 0.0
    %v73 = vadd.f32 %v71, 0.0
    %v74 = vadd.f32 %v72, %v73
    %75 = vst [vmem:[#allocation7] sm:$0xff] %v74
    // Predicated region
    $region18: #{tpu_custom_call.1} parent=1 // pred_check
      _
    $region19: #{tpu_custom_call.1} parent=1 // pred_check_branch
      %77 = sbr.rel (0) target = $region21
    $region20: #{tpu_custom_call.1} parent=1 // pred_region
      %s79 = ssub.s32 128, 128
      %80 = vsyncadd [#allocation4], %s79
      %s82 = sshll.u32 [#allocation7], 4
      %s83 = int_to_ptr.vmem [resolvable:$true] %s82
      %85 = dma.vmem_to_hbm [thread:$0]  %s83, 128, %s2, [#allocation4]
    $region21: #{tpu_custom_call.1} parent=1 // pred_fallthru
      _
    // Predicated region
    $region22: #{tpu_custom_call.1} parent=1 // pred_check
      _
    $region23: #{tpu_custom_call.1} parent=1 // pred_check_branch
      %87 = sbr.rel (0) target = $region25
    $region24: #{tpu_custom_call.1} parent=1 // pred_region
      %88 = dma.done [#allocation4], 128
    $region25: #{tpu_custom_call.1} parent=1 // pred_fallthru
      _
    %89 = vsyncpa [#allocation3], 1
    %90 = vsyncpa [#allocation6], 1
    %91 = vsyncpa [#allocation4], 1

</llo_original>
